<compile_context>
chip_gen: v6e
topology: v6e:2x2x1
jax: 0.10.0
libtpu: 0.0.40
codegen_flags: <defaults>
</compile_context>

<pallas_src>
from functools import partial

import jax
import jax.numpy as jnp
from jax.experimental import pallas as pl
from jax.experimental.pallas import tpu as pltpu

EPS = 1e-12
_LANE = 128  # TPU lane width / Toeplitz sub-block size


def _round_up(a, m):
    return ((a + m - 1) // m) * m


# ---------------------------------------------------------------------------
# Pass 1: tanh + impulse normalization (tiny, once per batch)
# ---------------------------------------------------------------------------
def _normalize_fir_kernel(fir_ref, out_ref):
    # fir_ref/out_ref: (C_f, Lf)
    h = jnp.tanh(fir_ref[...].astype(jnp.float32))
    e = jnp.sum(h * h, axis=-1, keepdims=True)          # (C_f, 1) per-channel energy
    e_mean = jnp.mean(e, axis=0, keepdims=True)          # (1, 1)   mean over channels
    # exact reciprocal (off the hot path); flip approx=True for the EUP fast path if desired
    scale = pl.reciprocal(jnp.sqrt(e_mean) + EPS)
    out_ref[...] = (h * scale).astype(out_ref.dtype)


# ---------------------------------------------------------------------------
# Pass 2: block-Toeplitz causal convolution on the MXU
# ---------------------------------------------------------------------------
def _fir_conv_kernel(toe_ref, x_ref, out_ref, halo_ref, *, n_prev, rows):
    # toe_ref : ((n_prev+1)*128, 128)  normalized taps, block-Toeplitz expanded (resident)
    # x_ref   : (rows, 128)            current time tile, time folded onto sublanes
    # out_ref : (rows, 128)
    # halo_ref: (max(n_prev,1), 128)   last n_prev rows of the previous tile (causal halo)
    t = pl.program_id(2)

    @pl.when(t == 0)
    def _init():
        halo_ref[...] = jnp.zeros_like(halo_ref)

    x_cur = x_ref[...].astype(jnp.float32)                              # (rows, 128)
    if n_prev > 0:
        x_all = jnp.concatenate([halo_ref[...], x_cur], axis=0)         # (n_prev+rows, 128)
    else:
        x_all = x_cur

    acc = jnp.zeros((rows, _LANE), jnp.float32)
    for p in range(n_prev + 1):                       # P+1 = ceil(fir_len/128)-ish matmuls
        xs = x_all[n_prev - p:n_prev - p + rows, :]   # static sublane-offset slice
        a_p = toe_ref[p * _LANE:(p + 1) * _LANE, :]   # aligned 128-row slice of the filter
        acc += jnp.dot(xs, a_p, preferred_element_type=jnp.float32)     # MXU

    out_ref[...] = acc.astype(out_ref.dtype)

    if n_prev > 0:
        halo_ref[...] = x_all[rows:rows + n_prev, :]  # carry tail to the next time tile


# ---------------------------------------------------------------------------
# Wrapper
# ---------------------------------------------------------------------------
def fir_filter_forward(x, fir, *, tile_rows=64):
    """FIRFilter.forward: x (B, C_in, L), fir (B, C_f, L_fir) -> (B, max(C_in,C_f), L)."""
    assert x.ndim == 3 and fir.ndim == 3
    B, C_in, L = x.shape
    Bf, C_f, Lf = fir.shape
    assert B == Bf
    # PyTorch broadcast semantics: channels must be 1 or equal.
    assert C_in == 1 or C_f == 1 or C_in == C_f, (C_in, C_f)
    assert tile_rows >= 8 and tile_rows % 8 == 0
    C_out = max(C_in, C_f)
    TB = _LANE
    P = -(-(Lf - 1) // TB) if Lf > 1 else 0          # previous 128-row blocks the taps reach

    # ---- pass 1: tanh + normalize_impulse (Pallas) --------------------------------------
    h_norm = pl.pallas_call(
        _normalize_fir_kernel,
        out_shape=jax.ShapeDtypeStruct((B, C_f, Lf), jnp.float32),
        grid_spec=pltpu.PrefetchScalarGridSpec(
            num_scalar_prefetch=0,
            grid=(B,),
            in_specs=[pl.BlockSpec((None, C_f, Lf), lambda b: (b, 0, 0))],
            out_specs=pl.BlockSpec((None, C_f, Lf), lambda b: (b, 0, 0)),
        ),
        compiler_params=pltpu.CompilerParams(dimension_semantics=("parallel",)),
    )(fir)

    # ---- layout plumbing only: block-Toeplitz expansion of the normalized taps ----------
    # A_p[i, j] = h[p*128 + j - i]  (0 elsewhere);  no arithmetic on the values.
    i_idx = jnp.arange(TB)[:, None]
    j_idx = jnp.arange(TB)[None, :]
    p_idx = jnp.arange(P + 1)[:, None, None]
    idx = p_idx * TB + j_idx - i_idx                                   # (P+1, TB, TB)
    valid = (idx >= 0) & (idx < Lf)
    idxc = jnp.clip(idx, 0, Lf - 1)
    toe = jnp.where(valid[None, None], h_norm[:, :, idxc], 0.0)        # (B, C_f, P+1, TB, TB)
    toe = toe.reshape(B, C_f, (P + 1) * TB, TB)

    # ---- fold time onto the sublane axis; tile the time axis into the grid --------------
    rows_total = -(-L // TB)
    R = min(tile_rows, _round_up(rows_total, 8))
    rows_padded = _round_up(rows_total, R)
    Lp = rows_padded * TB
    # Only pads when L is not a tile multiple (no left pad, no channel broadcast in HBM).
    xp = x if Lp == L else jnp.pad(x, ((0, 0), (0, 0), (0, Lp - L)))
    x4 = xp.reshape(B, C_in, rows_padded, TB)          # metadata-only reshape
    n_t = rows_padded // R

    # Channel broadcast handled by the index_maps (static choice, no HBM duplication).
    x_map = (lambda b, c, t: (b, c, t, 0)) if C_in == C_out else (lambda b, c, t: (b, 0, t, 0))
    h_map = (lambda b, c, t: (b, c, 0, 0)) if C_f == C_out else (lambda b, c, t: (b, 0, 0, 0))
    out_map = lambda b, c, t: (b, c, t, 0)

    kernel = partial(_fir_conv_kernel, n_prev=P, rows=R)
    out4 = pl.pallas_call(
        kernel,
        out_shape=jax.ShapeDtypeStruct((B, C_out, rows_padded, TB), x.dtype),
        grid_spec=pltpu.PrefetchScalarGridSpec(
            num_scalar_prefetch=0,
            grid=(B, C_out, n_t),
            in_specs=[
                pl.BlockSpec((None, None, (P + 1) * TB, TB), h_map),   # resident across t
                pl.BlockSpec((None, None, R, TB), x_map),
            ],
            out_specs=pl.BlockSpec((None, None, R, TB), out_map),
            scratch_shapes=[pltpu.VMEM((max(P, 1), TB), jnp.float32)],  # causal halo carry
        ),
        compiler_params=pltpu.CompilerParams(
            dimension_semantics=("parallel", "parallel", "arbitrary")),
    )(toe, x4)

    return out4.reshape(B, C_out, Lp)[:, :, :L]


# ---------------------------------------------------------------------------
# Pure-JAX reference (accurate f32 shift-and-MAC, no MXU) for correctness checking
# ---------------------------------------------------------------------------
def _ref_forward(x, fir):
    h = jnp.tanh(fir)
    e = jnp.sum(h * h, axis=-1, keepdims=True)
    e_mean = jnp.mean(e, axis=-2, keepdims=True)
    h = h / (jnp.sqrt(e_mean) + EPS)

    B, C_in, L = x.shape
    C_f, Lf = fir.shape[1], fir.shape[2]
    C_out = max(C_in, C_f)
    xb = jnp.broadcast_to(x, (B, C_out, L))
    hb = jnp.broadcast_to(h, (B, C_out, Lf))
    xpad = jnp.pad(xb, ((0, 0), (0, 0), (Lf - 1, 0)))

    y = jnp.zeros((B, C_out, L), jnp.float32)
    for k in range(Lf):
        start = Lf - 1 - k
        y = y + hb[:, :, k:k + 1] * xpad[:, :, start:start + L]
    return y


if __name__ == "__main__":
    key = jax.random.PRNGKey(0)
    kx, kh = jax.random.split(key)

    # processor_channel='mono' -> 1 filter channel broadcast over a stereo input (C_out=2).
    B, C_in, L = 2, 2, 4096
    C_f, fir_len = 1, 200     # fir_len=200 -> P=2 previous blocks, exercises the halo carry

    x = jax.random.normal(kx, (B, C_in, L), dtype=jnp.float32)
    fir = jax.random.normal(kh, (B, C_f, fir_len), dtype=jnp.float32)

    # tile_rows=8 -> 1024-sample time tiles -> 4 time tiles per (batch, channel) row.
    y = fir_filter_forward(x, fir, tile_rows=8)
    jax.block_until_ready(y)

    y_ref = _ref_forward(x, fir)
    assert y.shape == (B, max(C_in, C_f), L)
    # Tolerance accounts for the MXU's default reduced-precision f32 multiply path;
    # any indexing/halo bug would produce O(1) errors and still fail this check.
    assert jnp.allclose(y, y_ref, atol=2e-2, rtol=2e-2), \
        float(jnp.max(jnp.abs(y - y_ref)))

    print("KERNEL_OK")
</pallas_src>

<mosaic_0001>
module attributes {stable_mosaic.version = 11 : i64} {
  func.func @_normalize_fir_kernel(%arg0: i32, %arg1: memref<1x1x200xf32, #tpu.memory_space<vmem>>, %arg2: memref<1x1x200xf32, #tpu.memory_space<vmem>>) attributes {dimension_semantics = [#tpu.dimension_semantics<parallel>], iteration_bounds = array<i64: 2>, scalar_prefetch = 0 : i64, scratch_operands = 0 : i64, tpu.core_type = #tpu.core_type<tc>, window_params = [{transform_indices = @transform_0, window_bounds = array<i64: 1, 1, 200>}, {transform_indices = @transform_1, window_bounds = array<i64: 1, 1, 200>}]} {
    %c0 = arith.constant 0 : index
    %c0_0 = arith.constant 0 : index
    %c0_1 = arith.constant 0 : index
    %0 = vector.load %arg1[%c0, %c0_0, %c0_1] : memref<1x1x200xf32, #tpu.memory_space<vmem>>, vector<1x1x200xf32>
    %1 = vector.shape_cast %0 : vector<1x1x200xf32> to vector<1x200xf32>
    %2 = math.tanh %1 : vector<1x200xf32>
    %3 = arith.mulf %2, %2 : vector<1x200xf32>
    %cst = arith.constant dense<0.000000e+00> : vector<1xf32>
    %4 = vector.multi_reduction <add>, %3, %cst [1] : vector<1x200xf32> to vector<1xf32>
    %5 = vector.shape_cast %4 : vector<1xf32> to vector<1x1xf32>
    %cst_2 = arith.constant dense<0.000000e+00> : vector<1xf32>
    %6 = vector.multi_reduction <add>, %5, %cst_2 [0] : vector<1x1xf32> to vector<1xf32>
    %7 = vector.shape_cast %6 : vector<1xf32> to vector<1x1xf32>
    %cst_3 = arith.constant 1.000000e+00 : f32
    %8 = vector.broadcast %cst_3 : f32 to vector<1x1xf32>
    %9 = arith.divf %7, %8 : vector<1x1xf32>
    %10 = math.sqrt %9 : vector<1x1xf32>
    %cst_4 = arith.constant 9.99999996E-13 : f32
    %11 = vector.broadcast %cst_4 : f32 to vector<1x1xf32>
    %12 = arith.addf %10, %11 : vector<1x1xf32>
    %13 = tpu.reciprocal %12 : vector<1x1xf32> -> vector<1x1xf32>
    %14 = vector.broadcast %13 : vector<1x1xf32> to vector<1x200xf32>
    %15 = arith.mulf %2, %14 : vector<1x200xf32>
    %c0_5 = arith.constant 0 : index
    %c0_6 = arith.constant 0 : index
    %c0_7 = arith.constant 0 : index
    %16 = vector.load %arg2[%c0_5, %c0_6, %c0_7] : memref<1x1x200xf32, #tpu.memory_space<vmem>>, vector<1x1x200xf32>
    %17 = vector.shape_cast %16 : vector<1x1x200xf32> to vector<1x200xf32>
    %18 = vector.shape_cast %15 : vector<1x200xf32> to vector<1x1x200xf32>
    tpu.vector_store %arg2[%c0_5, %c0_6, %c0_7], %18 {strides = array<i32>} : memref<1x1x200xf32, #tpu.memory_space<vmem>>, vector<1x1x200xf32>,
    return
  }
  func.func @transform_0(%arg0: i32) -> (i32, i32, i32) {
    %c0_i32 = arith.constant 0 : i32
    %c0_i32_0 = arith.constant 0 : i32
    %c0_i32_1 = arith.constant 0 : i32
    return %arg0, %c0_i32, %c0_i32_0 : i32, i32, i32
  }
  func.func @transform_1(%arg0: i32) -> (i32, i32, i32) {
    %c0_i32 = arith.constant 0 : i32
    %c0_i32_0 = arith.constant 0 : i32
    %c0_i32_1 = arith.constant 0 : i32
    return %arg0, %c0_i32, %c0_i32_0 : i32, i32, i32
  }
}

</mosaic_0001>

<llo_original>
// kernel: tpu_custom_call.1
$region0: #{tpu_custom_call.1}
  #allocation0 [shape = 'u32[]', space=smem, size = 0x4, offset = 0x4, fixed_abs, tag = 'smem constant byte address 0x4 - core index']
  #allocation1 [shape = 'u32[144,128]{1,0:T(1,128)}', space=vmem, size = 0x12000, scoped, tag = 'internal scratch']
  %s0 = inlined_call_operand.hbm [shape: f32[2,1,200], index: 0, kind: input, shape index: {}]
  %s1 = inlined_call_operand.hbm [shape: f32[2,1,200], index: 1, kind: output, shape index: {}]
  %s2 = sld [smem:[#allocation0]]
  $region41: #{tpu_custom_call.1} parent=0
    _
  %s4 = ssub.s32 1, %s2
  %s5 = scalar_select 0, %s4, %s2
  $region1: #{tpu_custom_call.1} parent=0
    #allocation2 [shape = 'u8[2048]{0}', space=vmem, size = 0x800, scoped, tag = 'input window, operand 0']
    #allocation3 [shape = 's32[2]{0}', space=sflag, size = 0x8, scoped, tag = 'scoped memory for tpu_custom_call.1']
    #allocation4 [shape = 's32[2]{0}', space=sflag, size = 0x8, scoped, tag = 'scoped memory for tpu_custom_call.1']
    #allocation5 [shape = 'u8[2048]{0}', space=vmem, size = 0x800, scoped, tag = 'output window, operand 0']
    %6 = vsyncpa [#allocation3], 0
    %s7 = scalar_lea.sflag [#allocation3], 1
    %8 = vsyncpa %s7, 0
    %9 = vsyncpa [#allocation4], 0
    %s10 = scalar_lea.sflag [#allocation4], 1
    %11 = vsyncpa %s10, 0
    loop: start=0, step=1, limit=4
    $region2: #{tpu_custom_call.1} parent=1 // loop_pre_header
      _
    $region3: #{tpu_custom_call.1} parent=1 // loop_header
      %s13 = sphi 0, %s17
      %p14 = scmp.ge.s32.totalorder %s13, 4
      %s23 = sphi 0, %s25
      %s26 = sphi 0, %s23
      %s27 = sphi 0, %s26
      %s43 = sphi 0, %s27
      %s49 = sphi 0, %s51
      %s52 = sphi 0, %s49
      %s53 = sphi 0, %s52
      %s69 = sphi 0, %s53
    $region4: #{tpu_custom_call.1} parent=1 // loop_header_branch
      %16 = sbr.rel (%p14) target = $region8
    $region5: #{tpu_custom_call.1} parent=1 // loop_body
      %s18 = ssub.s32 %s13, 1
      %s19 = ssub.s32 %s13, 2
      %s20 = sadd.s32 %s13, 1
      %s21 = ssub.s32 %s13, %s20
      %p22 = scmp.eq.s32.totalorder %s21, 0
      %s24 = sadd.s32 %s23, 1
      %s25 = scalar_select %p22, %s23, %s24
      %p28 = pneg %p22
      %p29 = scmp.eq.s32.totalorder %s13, 1
      %p30 = por %p28, %p29
      %p31 = scmp.ne.s32.totalorder %s23, %s26
      %p32 = scmp.eq.s32.totalorder %s13, 0
      %p33 = por %p31, %p32
      %p34 = scmp.ne.s32.totalorder %s23, %s26
      %p35 = scmp.eq.s32.totalorder %s18, 1
      %p36 = por %p34, %p35
      %p37 = scmp.ne.s32.totalorder %s26, %s27
      %p38 = scmp.eq.s32.totalorder %s18, 0
      %p39 = por %p37, %p38
      %p40 = scmp.ne.s32.totalorder %s26, %s27
      %p41 = scmp.eq.s32.totalorder %s19, 1
      %p42 = por %p40, %p41
      %p44 = scmp.ne.s32.totalorder %s27, %s43
      %p45 = scmp.eq.s32.totalorder %s19, 0
      %p46 = por %p44, %p45
      %s47 = ssub.s32 %s13, %s20
      %p48 = scmp.eq.s32.totalorder %s47, 0
      %s50 = sadd.s32 %s49, 1
      %s51 = scalar_select %p48, %s49, %s50
      %p54 = pneg %p48
      %p55 = scmp.eq.s32.totalorder %s13, 1
      %p56 = por %p54, %p55
      %p57 = scmp.ne.s32.totalorder %s49, %s52
      %p58 = scmp.eq.s32.totalorder %s13, 0
      %p59 = por %p57, %p58
      %p60 = scmp.ne.s32.totalorder %s49, %s52
      %p61 = scmp.eq.s32.totalorder %s18, 1
      %p62 = por %p60, %p61
      %p63 = scmp.ne.s32.totalorder %s52, %s53
      %p64 = scmp.eq.s32.totalorder %s18, 0
      %p65 = por %p63, %p64
      %p66 = scmp.ne.s32.totalorder %s52, %s53
      %p67 = scmp.eq.s32.totalorder %s19, 1
      %p68 = por %p66, %p67
      %p70 = scmp.ne.s32.totalorder %s53, %s69
      %p71 = scmp.eq.s32.totalorder %s19, 0
      %p72 = por %p70, %p71
      %p73 = scmp.le.s32.totalorder 1, %s13
      %p74 = scmp.lt.s32.totalorder %s13, 3
      %p75 = pnand %p73, %p74
      %p76 = pneg %p75
      // Predicated region
      $region9: #{tpu_custom_call.1} parent=5 // pred_check
        _
      $region10: #{tpu_custom_call.1} parent=5 // pred_check_branch
        %78 = sbr.rel (%p75) target = $region12
      $region11: #{tpu_custom_call.1} parent=5 // pred_region
        %s79 = ssub.s32 %s13, 1
      $region12: #{tpu_custom_call.1} parent=5 // pred_fallthru
        _
      %p80 = scmp.lt.s32.totalorder %s13, 2
      // Predicated region
      $region13: #{tpu_custom_call.1} parent=5 // pred_check
        %p81 = pneg %p80
      $region14: #{tpu_custom_call.1} parent=5 // pred_check_branch
        %83 = sbr.rel (%p81) target = $region16
      $region15: #{tpu_custom_call.1} parent=5 // pred_region
        // Predicated region
        $region17: #{tpu_custom_call.1} parent=15 // pred_check
          %p84 = pneg %p33
        $region18: #{tpu_custom_call.1} parent=15 // pred_check_branch
          %86 = sbr.rel (%p84) target = $region20
        $region19: #{tpu_custom_call.1} parent=15 // pred_region
          %s87 = sand.u32 %s23, 1
          %s88 = scalar_lea.sflag [#allocation3], %s87
          %s89 = sand.u32 %s23, 1
          %s90 = smul.addr %s89, 2
          %s91 = scalar_lea.vmem [#allocation2], %s90
          %s93 = ssub.s32 32, 32
          %94 = vsyncadd %s88, %s93
          %s95 = smul.addr %s13, 2
          %s96 = smul.addr %s95, 16
          %s97 = scalar_lea.hbm %s0, %s96
          %s99 = sshll.u32 %s91, 4
          %s100 = int_to_ptr.vmem [resolvable:$true] %s99
          %102 = dma.hbm_to_vmem [thread:$0]  %s97, 32, %s100, %s88
        $region20: #{tpu_custom_call.1} parent=15 // pred_fallthru
          _
      $region16: #{tpu_custom_call.1} parent=5 // pred_fallthru
        _
      %p103 = scmp.le.s32.totalorder 1, %s13
      %p104 = scmp.lt.s32.totalorder %s13, 3
      %p105 = pnand %p103, %p104
      %p106 = pneg %p105
      // Predicated region
      $region21: #{tpu_custom_call.1} parent=5 // pred_check
        _
      $region22: #{tpu_custom_call.1} parent=5 // pred_check_branch
        %108 = sbr.rel (%p105) target = $region24
      $region23: #{tpu_custom_call.1} parent=5 // pred_region
        %s109 = ssub.s32 %s13, 1
        %s110 = sand.u32 %s26, 1
        %s111 = scalar_lea.sflag [#allocation3], %s110
        %s112 = sand.u32 %s26, 1
        %s113 = smul.addr %s112, 2
        %s114 = scalar_lea.vmem [#allocation2], %s113
        // Predicated region
        $region25: #{tpu_custom_call.1} parent=23 // pred_check
          %p115 = pneg %p39
        $region26: #{tpu_custom_call.1} parent=23 // pred_check_branch
          %117 = sbr.rel (%p115) target = $region28
        $region27: #{tpu_custom_call.1} parent=23 // pred_region
          %118 = dma.done %s111, 32
        $region28: #{tpu_custom_call.1} parent=23 // pred_fallthru
          _
        %s119 = sand.u32 %s26, 1
        %s120 = scalar_lea.sflag [#allocation3], %s119
        %s121 = sand.u32 %s26, 1
        %s122 = smul.addr %s121, 2
        %s123 = scalar_lea.vmem [#allocation2], %s122
        %p124 = pneg %p39
        %p125 = pneg %p36
        %p126 = pneg %p65
        %p127 = pneg %p62
        %s128 = sand.u32 %s52, 1
        %s129 = scalar_lea.sflag [#allocation4], %s128
        %s130 = sand.u32 %s52, 1
        %s131 = smul.addr %s130, 2
        %s132 = scalar_lea.vmem [#allocation5], %s131
        %v133 = vld [vmem:[%s114] sm:$0x3]
        %v134 = vtanh.pop %v133
        %v135 = vmul.f32 %v134, %v134
        %v137 = vlaneseq
        %v138 = vshrl.u32 %v137, 7
        %v139 = vsub.s32 0, %v138
        %v140 = vrot.slane %v135, %v139
        %v141 = vlaneseq
        %v142 = vshrl.u32 %v141, 7
        %v143 = vsub.s32 1, %v142
        %v144 = vrot.slane %v135, %v143
        %vm147 = vcmask 1040384
        %v148 = vsel %vm147, %v140, 0.0
        %vm149 = vcmask 581632
        %v150 = vsel %vm149, %v144, 0.0
        %v151 = vadd.f32 %v148, %v150
        %152 = vadd.xlane.f32.xlu0 %v151
        %v153 = vpop.xlane.xlu0 %152
        %v154 = vadd.f32 %v153, 0.0
        %v155 = vrsqrt.pop %v154
        %v156 = vmul.f32 %v154, %v155
        %vm157 = vcmp.eq.f32.partialorder %v154, inf
        %v158 = vsel %vm157, %v154, %v156
        %vm159 = vcmp.eq.f32.partialorder %v154, 0.0
        %v160 = vand.u32 %v154, 2147483648
        %v161 = vsel %vm159, %v160, %v158
        %v162 = vadd.f32 %v161, 1e-12
        %v163 = vrcp.pop %v162
        %v165 = vlaneseq
        %v166 = vshrl.u32 %v165, 7
        %v167 = vsub.s32 0, %v166
        %v168 = vrot.slane %v163, %v167
        %v170 = vmul.f32 %v134, %v168
        %v171 = vlaneseq
        %vm172 = vcmp.ge.s32.totalorder %v171, 0
        %vm173 = vcmp.lt.s32.totalorder %v171, 200
        %vm174 = vmand %vm172, %vm173
        %175 = vst.msk [vmem:[%s132] sm:$0x3] %vm174, %v170
        %s176 = sand.u32 %s52, 1
        %s177 = scalar_lea.sflag [#allocation4], %s176
        %s178 = sand.u32 %s52, 1
        %s179 = smul.addr %s178, 2
        %s180 = scalar_lea.vmem [#allocation5], %s179
        // Predicated region
        $region29: #{tpu_custom_call.1} parent=23 // pred_check
          %p181 = pneg %p62
        $region30: #{tpu_custom_call.1} parent=23 // pred_check_branch
          %183 = sbr.rel (%p181) target = $region32
        $region31: #{tpu_custom_call.1} parent=23 // pred_region
          %s185 = ssub.s32 32, 32
          %186 = vsyncadd %s177, %s185
          %s187 = smul.addr %s18, 2
          %s188 = smul.addr %s187, 16
          %s189 = scalar_lea.hbm %s1, %s188
          %s191 = sshll.u32 %s180, 4
          %s192 = int_to_ptr.vmem [resolvable:$true] %s191
          %194 = dma.vmem_to_hbm [thread:$0]  %s192, 32, %s189, %s177
        $region32: #{tpu_custom_call.1} parent=23 // pred_fallthru
          _
      $region24: #{tpu_custom_call.1} parent=5 // pred_fallthru
        _
      %p195 = scmp.le.s32.totalorder 2, %s13
      // Predicated region
      $region33: #{tpu_custom_call.1} parent=5 // pred_check
        %p196 = pneg %p195
      $region34: #{tpu_custom_call.1} parent=5 // pred_check_branch
        %198 = sbr.rel (%p196) target = $region36
      $region35: #{tpu_custom_call.1} parent=5 // pred_region
        %s199 = ssub.s32 %s13, 2
        // Predicated region
        $region37: #{tpu_custom_call.1} parent=35 // pred_check
          %p200 = pneg %p68
        $region38: #{tpu_custom_call.1} parent=35 // pred_check_branch
          %202 = sbr.rel (%p200) target = $region40
        $region39: #{tpu_custom_call.1} parent=35 // pred_region
          %s203 = sand.u32 %s53, 1
          %s204 = scalar_lea.sflag [#allocation4], %s203
          %s205 = sand.u32 %s53, 1
          %s206 = smul.addr %s205, 2
          %s207 = scalar_lea.vmem [#allocation5], %s206
          %208 = dma.done %s204, 32
        $region40: #{tpu_custom_call.1} parent=35 // pred_fallthru
          _
      $region36: #{tpu_custom_call.1} parent=5 // pred_fallthru
        _
    $region6: #{tpu_custom_call.1} parent=1 // loop_footer
      %s17 = sadd.s32 1, %s13
    $region7: #{tpu_custom_call.1} parent=1 // loop_footer_branch
      %12 = sbr.rel target = $region3
    $region8: #{tpu_custom_call.1} parent=1 // loop_exit
      _
    %209 = vsyncpa [#allocation3], 1
    %s210 = scalar_lea.sflag [#allocation3], 1
    %211 = vsyncpa %s210, 1
    %212 = vsyncpa [#allocation4], 1
    %s213 = scalar_lea.sflag [#allocation4], 1
    %214 = vsyncpa %s213, 1

</llo_original>
